<compile_context>
chip_gen: v7x
topology: tpu7x:2x2x1
jax: 0.10.0
libtpu: 0.0.40
codegen_flags: <defaults>
</compile_context>

<pallas_src>
import functools

import numpy as np
import jax
import jax.numpy as jnp
from jax.experimental import pallas as pl
from jax.experimental.pallas import tpu as pltpu


# ---------------------------------------------------------------------------
# Glue: natural-cubic-spline "second derivative" matrix C (depends only on the
# number of nodes).  M = y @ C.T gives the second derivatives at the knots for
# control values y, with natural boundary conditions (M_0 = M_{n-1} = 0).
# ---------------------------------------------------------------------------
def natural_cubic_matrix(n: int) -> jnp.ndarray:
    h = 1.0 / (n - 1)
    A = np.zeros((n - 2, n - 2), dtype=np.float64)
    for i in range(n - 2):
        A[i, i] = 2.0 * h / 3.0
        if i > 0:
            A[i, i - 1] = h / 6.0
        if i < n - 3:
            A[i, i + 1] = h / 6.0
    D = np.zeros((n - 2, n), dtype=np.float64)
    for i in range(n - 2):
        D[i, i] = 1.0 / h
        D[i, i + 1] = -2.0 / h
        D[i, i + 2] = 1.0 / h
    C = np.zeros((n, n), dtype=np.float64)
    C[1: n - 1] = np.linalg.solve(A, D)
    return jnp.asarray(C, dtype=jnp.float32)


# ---------------------------------------------------------------------------
# Pallas kernel: per-pixel spline evaluation (the hot path).
#   coef_ref : SMEM (K, 4*(nodes-1)) pre-scaled per-interval Horner coefficients
#   x_ref    : VMEM (S, 128) pixel tile of row pl.program_id(0)
#   o_ref    : VMEM (S, 128) enhanced pixel tile
# Coefficients are pre-scaled so f is evaluated in the unit-interval local
# coordinate s = t*(nodes-1) - j:  f(s) = a + s*(b + s*(c + s*d)).
# The interval gather is a radix-2 select tree on the bits of j: one bit-test
# mask per level, shared across all four coefficient tables (VPU selects on
# splat scalars -- no cross-lane gather).
# ---------------------------------------------------------------------------
def spline_kernel(coef_ref, x_ref, o_ref, *, nodes: int):
    n_int = nodes - 1
    inv_h = float(n_int)                       # 1/h (constant multiply, no divide)
    row = pl.program_id(0)

    # --- Hoist ALL SMEM scalar reads before the vector code (keeps sld/splat
    #     traffic off the hot vector bundles). ------------------------------
    tables = [[coef_ref[row, t * n_int + i] for i in range(n_int)]
              for t in range(4)]               # [a, b, c, d][interval]

    # --- Per-pixel interval classification.  Pixel intensities are >= 0, so
    #     only the upper clamp is needed; pre-scaled coefficients remove the
    #     j*h multiply (s = u - j directly). --------------------------------
    t = x_ref[...].astype(jnp.float32)         # (S, 128); cast-on-load if bf16 storage
    u = t * inv_h
    j = jnp.minimum(jnp.floor(u), float(n_int - 1))
    s = u - j                                  # local coordinate in [0, 1]
    ji = j.astype(jnp.int32)                   # exact small integer

    # --- Binary (radix-2) select tree over the bits of the interval index:
    #     ceil(log2(n_int)) levels, one bit-test mask per level shared by all
    #     four tables, n_int-1 vselects per table in total. ------------------
    level = 0
    while len(tables[0]) > 1:
        bit = jnp.bitwise_and(ji, 1 << level) != 0
        new_tables = []
        for vals in tables:
            merged = [jnp.where(bit, vals[i + 1], vals[i])
                      for i in range(0, len(vals) - 1, 2)]
            if len(vals) % 2 == 1:
                # Odd leftover: its bucket index is even, so bit `level` is 0
                # for every element that maps to it -> plain pass-through.
                merged.append(vals[-1])
            new_tables.append(merged)
        tables = new_tables
        level += 1

    a, b, c, d = (tbl[0] for tbl in tables)
    o_ref[...] = (a + s * (b + s * (c + s * d))).astype(o_ref.dtype)   # Horner


# ---------------------------------------------------------------------------
# Wrapper: reproduces Splines.forward(image, parameters)
# ---------------------------------------------------------------------------
def splines_forward(image: jnp.ndarray, parameters: jnp.ndarray, nodes: int,
                    *, block_sublanes: int = 1024,
                    storage_dtype=None) -> jnp.ndarray:
    N, C, H, W = image.shape
    K = N * 3                              # k = image.size(0) * 3 (module hard-codes 3)
    total = N * C * H * W
    assert total % K == 0, "image numel must be divisible by 3*batch (module assumes RGB)"
    P = total // K

    x = image.reshape(K, P).astype(jnp.float32)             # x = image.view(k, -1)
    y = parameters.reshape(K, nodes).astype(jnp.float32)    # y = parameters.view(k, -1)

    # Tiny per-row precompute (glue): second derivatives, then the four
    # PRE-SCALED per-interval Horner coefficients for the unit-interval local
    # coordinate s = t*(nodes-1) - j:
    #   f(s) = a + s*(b*h) + s^2*(c*h^2) + s^3*(d*h^3)
    M = y @ natural_cubic_matrix(nodes).T                   # (K, nodes)
    n_int = nodes - 1
    h = 1.0 / n_int
    y0, y1 = y[:, :-1], y[:, 1:]
    m0, m1 = M[:, :-1], M[:, 1:]
    a = y0
    b = (y1 - y0) - (h * h / 6.0) * (2.0 * m0 + m1)         # = b_orig * h
    c = 0.5 * (h * h) * m0                                  # = c_orig * h^2
    d = (h * h / 6.0) * (m1 - m0)                           # = d_orig * h^3
    coef = jnp.concatenate([a, b, c, d], axis=1)            # (K, 4*n_int)

    # Sublane/lane-dense layout: pixels fill (S, 128) tiles; pad P as needed.
    LANES = 128
    sub = pl.cdiv(P, LANES)                                  # 128-lane rows
    sub8 = ((sub + 7) // 8) * 8
    S = min(block_sublanes, sub8)                            # multiple of 8
    # v7x megacore guardrail: if each row is one tile and K is odd, split rows
    # into two tiles so both TensorCores get an even share of grid steps.
    if S == sub8 and (K % 2 == 1) and sub8 >= 16:
        S = ((sub8 // 2 + 7) // 8) * 8
    padded_sub = ((sub + S - 1) // S) * S
    Ppad = padded_sub * LANES
    if Ppad != P:
        x = jnp.pad(x, ((0, 0), (0, Ppad - P)))              # zeros are in-range
    x3 = x.reshape(K, padded_sub, LANES)
    if storage_dtype is not None:
        # Optional narrow storage (e.g. jnp.bfloat16) for mem-bound chips (v5e):
        # halves read bytes; kernel still computes in f32 (cast-on-load).
        x3 = x3.astype(storage_dtype)

    grid = (K, padded_sub // S)
    out = pl.pallas_call(
        functools.partial(spline_kernel, nodes=nodes),
        out_shape=jax.ShapeDtypeStruct((K, padded_sub, LANES), jnp.float32),
        grid=grid,
        in_specs=[
            # Coefficient table: whole (tiny) array resident in SMEM.
            pl.BlockSpec(memory_space=pltpu.MemorySpace.SMEM),
            # Pixel tile: (S, 128), one (batch, channel) row per grid-axis-0 step.
            pl.BlockSpec((pl.Squeezed(), S, LANES), lambda k, t: (k, t, 0)),
        ],
        out_specs=pl.BlockSpec((pl.Squeezed(), S, LANES), lambda k, t: (k, t, 0)),
        compiler_params=pltpu.CompilerParams(
            dimension_semantics=("parallel", "parallel")),   # disjoint outputs; megacore
    )(coef, x3)

    out = out.reshape(K, Ppad)[:, :P]
    return out.reshape(image.shape)                          # z.view_as(image)


# Pure-JAX reference (same math, gather-based) for correctness check.
def splines_reference(image, parameters, nodes):
    N, C, H, W = image.shape
    K = N * 3
    P = (N * C * H * W) // K
    n = nodes
    h = 1.0 / (n - 1)
    x = image.reshape(K, P).astype(jnp.float32)
    y = parameters.reshape(K, nodes).astype(jnp.float32)
    M = y @ natural_cubic_matrix(nodes).T
    j = jnp.clip(jnp.floor(x * (n - 1)).astype(jnp.int32), 0, n - 2)
    yj = jnp.take_along_axis(y, j, axis=1)
    yj1 = jnp.take_along_axis(y, j + 1, axis=1)
    mj = jnp.take_along_axis(M, j, axis=1)
    mj1 = jnp.take_along_axis(M, j + 1, axis=1)
    s = x - j.astype(jnp.float32) * h
    z = (yj + s * ((yj1 - yj) / h - h * (2.0 * mj + mj1) / 6.0)
         + s * s * mj * 0.5 + s ** 3 * (mj1 - mj) / (6.0 * h))
    return z.reshape(image.shape)


if __name__ == "__main__":
    nodes = 8
    N, C, H, W = 2, 3, 16, 16

    key = jax.random.PRNGKey(0)
    k_img, k_par = jax.random.split(key)

    # image in [0, 1] (pixel intensities), NCHW like the PyTorch module.
    image = jax.random.uniform(k_img, (N, C, H, W), dtype=jnp.float32)

    # Deterministic "predicted" spline parameters: identity curve + small noise.
    knots = jnp.linspace(0.0, 1.0, nodes, dtype=jnp.float32)
    base = jnp.tile(knots, (N, C, 1))                               # (N, C, nodes)
    noise = 0.1 * jax.random.normal(k_par, (N, C, nodes), dtype=jnp.float32)
    parameters = (base + noise).reshape(N, nodes * C)               # parameters_count = nodes*3

    out = splines_forward(image, parameters, nodes)
    out = jax.block_until_ready(out)

    ref = splines_reference(image, parameters, nodes)
    np.testing.assert_allclose(np.asarray(out), np.asarray(ref), rtol=1e-5, atol=1e-5)

    assert out.shape == image.shape and out.dtype == jnp.float32
    print("KERNEL_OK")
</pallas_src>

<mosaic_0001>
module attributes {stable_mosaic.version = 11 : i64} {
  func.func @spline_kernel(%arg0: i32, %arg1: i32, %arg2: memref<6x28xf32, #tpu.memory_space<smem>>, %arg3: memref<1x8x128xf32, #tpu.memory_space<vmem>>, %arg4: memref<1x8x128xf32, #tpu.memory_space<vmem>>) attributes {dimension_semantics = [#tpu.dimension_semantics<parallel>, #tpu.dimension_semantics<parallel>], iteration_bounds = array<i64: 6, 1>, scalar_prefetch = 0 : i64, scratch_operands = 0 : i64, tpu.core_type = #tpu.core_type<tc>, window_params = [{transform_indices = @transform_0, window_bounds = array<i64: 6, 28>}, {transform_indices = @transform_1, window_bounds = array<i64: 1, 8, 128>}, {transform_indices = @transform_2, window_bounds = array<i64: 1, 8, 128>}]} {
    %0 = arith.index_cast %arg0 : i32 to index
    %c0 = arith.constant 0 : index
    %1 = memref.load %arg2[%0, %c0] : memref<6x28xf32, #tpu.memory_space<smem>>
    %2 = arith.index_cast %arg0 : i32 to index
    %c1 = arith.constant 1 : index
    %3 = memref.load %arg2[%2, %c1] : memref<6x28xf32, #tpu.memory_space<smem>>
    %4 = arith.index_cast %arg0 : i32 to index
    %c2 = arith.constant 2 : index
    %5 = memref.load %arg2[%4, %c2] : memref<6x28xf32, #tpu.memory_space<smem>>
    %6 = arith.index_cast %arg0 : i32 to index
    %c3 = arith.constant 3 : index
    %7 = memref.load %arg2[%6, %c3] : memref<6x28xf32, #tpu.memory_space<smem>>
    %8 = arith.index_cast %arg0 : i32 to index
    %c4 = arith.constant 4 : index
    %9 = memref.load %arg2[%8, %c4] : memref<6x28xf32, #tpu.memory_space<smem>>
    %10 = arith.index_cast %arg0 : i32 to index
    %c5 = arith.constant 5 : index
    %11 = memref.load %arg2[%10, %c5] : memref<6x28xf32, #tpu.memory_space<smem>>
    %12 = arith.index_cast %arg0 : i32 to index
    %c6 = arith.constant 6 : index
    %13 = memref.load %arg2[%12, %c6] : memref<6x28xf32, #tpu.memory_space<smem>>
    %14 = arith.index_cast %arg0 : i32 to index
    %c7 = arith.constant 7 : index
    %15 = memref.load %arg2[%14, %c7] : memref<6x28xf32, #tpu.memory_space<smem>>
    %16 = arith.index_cast %arg0 : i32 to index
    %c8 = arith.constant 8 : index
    %17 = memref.load %arg2[%16, %c8] : memref<6x28xf32, #tpu.memory_space<smem>>
    %18 = arith.index_cast %arg0 : i32 to index
    %c9 = arith.constant 9 : index
    %19 = memref.load %arg2[%18, %c9] : memref<6x28xf32, #tpu.memory_space<smem>>
    %20 = arith.index_cast %arg0 : i32 to index
    %c10 = arith.constant 10 : index
    %21 = memref.load %arg2[%20, %c10] : memref<6x28xf32, #tpu.memory_space<smem>>
    %22 = arith.index_cast %arg0 : i32 to index
    %c11 = arith.constant 11 : index
    %23 = memref.load %arg2[%22, %c11] : memref<6x28xf32, #tpu.memory_space<smem>>
    %24 = arith.index_cast %arg0 : i32 to index
    %c12 = arith.constant 12 : index
    %25 = memref.load %arg2[%24, %c12] : memref<6x28xf32, #tpu.memory_space<smem>>
    %26 = arith.index_cast %arg0 : i32 to index
    %c13 = arith.constant 13 : index
    %27 = memref.load %arg2[%26, %c13] : memref<6x28xf32, #tpu.memory_space<smem>>
    %28 = arith.index_cast %arg0 : i32 to index
    %c14 = arith.constant 14 : index
    %29 = memref.load %arg2[%28, %c14] : memref<6x28xf32, #tpu.memory_space<smem>>
    %30 = arith.index_cast %arg0 : i32 to index
    %c15 = arith.constant 15 : index
    %31 = memref.load %arg2[%30, %c15] : memref<6x28xf32, #tpu.memory_space<smem>>
    %32 = arith.index_cast %arg0 : i32 to index
    %c16 = arith.constant 16 : index
    %33 = memref.load %arg2[%32, %c16] : memref<6x28xf32, #tpu.memory_space<smem>>
    %34 = arith.index_cast %arg0 : i32 to index
    %c17 = arith.constant 17 : index
    %35 = memref.load %arg2[%34, %c17] : memref<6x28xf32, #tpu.memory_space<smem>>
    %36 = arith.index_cast %arg0 : i32 to index
    %c18 = arith.constant 18 : index
    %37 = memref.load %arg2[%36, %c18] : memref<6x28xf32, #tpu.memory_space<smem>>
    %38 = arith.index_cast %arg0 : i32 to index
    %c19 = arith.constant 19 : index
    %39 = memref.load %arg2[%38, %c19] : memref<6x28xf32, #tpu.memory_space<smem>>
    %40 = arith.index_cast %arg0 : i32 to index
    %c20 = arith.constant 20 : index
    %41 = memref.load %arg2[%40, %c20] : memref<6x28xf32, #tpu.memory_space<smem>>
    %42 = arith.index_cast %arg0 : i32 to index
    %c21 = arith.constant 21 : index
    %43 = memref.load %arg2[%42, %c21] : memref<6x28xf32, #tpu.memory_space<smem>>
    %44 = arith.index_cast %arg0 : i32 to index
    %c22 = arith.constant 22 : index
    %45 = memref.load %arg2[%44, %c22] : memref<6x28xf32, #tpu.memory_space<smem>>
    %46 = arith.index_cast %arg0 : i32 to index
    %c23 = arith.constant 23 : index
    %47 = memref.load %arg2[%46, %c23] : memref<6x28xf32, #tpu.memory_space<smem>>
    %48 = arith.index_cast %arg0 : i32 to index
    %c24 = arith.constant 24 : index
    %49 = memref.load %arg2[%48, %c24] : memref<6x28xf32, #tpu.memory_space<smem>>
    %50 = arith.index_cast %arg0 : i32 to index
    %c25 = arith.constant 25 : index
    %51 = memref.load %arg2[%50, %c25] : memref<6x28xf32, #tpu.memory_space<smem>>
    %52 = arith.index_cast %arg0 : i32 to index
    %c26 = arith.constant 26 : index
    %53 = memref.load %arg2[%52, %c26] : memref<6x28xf32, #tpu.memory_space<smem>>
    %54 = arith.index_cast %arg0 : i32 to index
    %c27 = arith.constant 27 : index
    %55 = memref.load %arg2[%54, %c27] : memref<6x28xf32, #tpu.memory_space<smem>>
    %c0_0 = arith.constant 0 : index
    %c0_1 = arith.constant 0 : index
    %c0_2 = arith.constant 0 : index
    %56 = vector.load %arg3[%c0_0, %c0_1, %c0_2] : memref<1x8x128xf32, #tpu.memory_space<vmem>>, vector<1x8x128xf32>
    %57 = vector.shape_cast %56 : vector<1x8x128xf32> to vector<8x128xf32>
    %cst = arith.constant 7.000000e+00 : f32
    %58 = vector.broadcast %cst : f32 to vector<8x128xf32>
    %59 = arith.mulf %57, %58 : vector<8x128xf32>
    %60 = math.floor %59 : vector<8x128xf32>
    %cst_3 = arith.constant 6.000000e+00 : f32
    %61 = vector.broadcast %cst_3 : f32 to vector<8x128xf32>
    %62 = arith.minimumf %60, %61 : vector<8x128xf32>
    %63 = arith.subf %59, %62 : vector<8x128xf32>
    %64 = arith.fptosi %62 : vector<8x128xf32> to vector<8x128xi32>
    %c1_i32 = arith.constant 1 : i32
    %65 = vector.broadcast %c1_i32 : i32 to vector<8x128xi32>
    %66 = arith.andi %64, %65 : vector<8x128xi32>
    %c0_i32 = arith.constant 0 : i32
    %67 = vector.broadcast %c0_i32 : i32 to vector<8x128xi32>
    %68 = arith.cmpi ne, %66, %67 : vector<8x128xi32>
    %69 = vector.broadcast %3 : f32 to vector<8x128xf32>
    %70 = vector.broadcast %1 : f32 to vector<8x128xf32>
    %71 = arith.select %68, %69, %70 : vector<8x128xi1>, vector<8x128xf32>
    %72 = vector.broadcast %7 : f32 to vector<8x128xf32>
    %73 = vector.broadcast %5 : f32 to vector<8x128xf32>
    %74 = arith.select %68, %72, %73 : vector<8x128xi1>, vector<8x128xf32>
    %75 = vector.broadcast %11 : f32 to vector<8x128xf32>
    %76 = vector.broadcast %9 : f32 to vector<8x128xf32>
    %77 = arith.select %68, %75, %76 : vector<8x128xi1>, vector<8x128xf32>
    %78 = vector.broadcast %17 : f32 to vector<8x128xf32>
    %79 = vector.broadcast %15 : f32 to vector<8x128xf32>
    %80 = arith.select %68, %78, %79 : vector<8x128xi1>, vector<8x128xf32>
    %81 = vector.broadcast %21 : f32 to vector<8x128xf32>
    %82 = vector.broadcast %19 : f32 to vector<8x128xf32>
    %83 = arith.select %68, %81, %82 : vector<8x128xi1>, vector<8x128xf32>
    %84 = vector.broadcast %25 : f32 to vector<8x128xf32>
    %85 = vector.broadcast %23 : f32 to vector<8x128xf32>
    %86 = arith.select %68, %84, %85 : vector<8x128xi1>, vector<8x128xf32>
    %87 = vector.broadcast %31 : f32 to vector<8x128xf32>
    %88 = vector.broadcast %29 : f32 to vector<8x128xf32>
    %89 = arith.select %68, %87, %88 : vector<8x128xi1>, vector<8x128xf32>
    %90 = vector.broadcast %35 : f32 to vector<8x128xf32>
    %91 = vector.broadcast %33 : f32 to vector<8x128xf32>
    %92 = arith.select %68, %90, %91 : vector<8x128xi1>, vector<8x128xf32>
    %93 = vector.broadcast %39 : f32 to vector<8x128xf32>
    %94 = vector.broadcast %37 : f32 to vector<8x128xf32>
    %95 = arith.select %68, %93, %94 : vector<8x128xi1>, vector<8x128xf32>
    %96 = vector.broadcast %45 : f32 to vector<8x128xf32>
    %97 = vector.broadcast %43 : f32 to vector<8x128xf32>
    %98 = arith.select %68, %96, %97 : vector<8x128xi1>, vector<8x128xf32>
    %99 = vector.broadcast %49 : f32 to vector<8x128xf32>
    %100 = vector.broadcast %47 : f32 to vector<8x128xf32>
    %101 = arith.select %68, %99, %100 : vector<8x128xi1>, vector<8x128xf32>
    %102 = vector.broadcast %53 : f32 to vector<8x128xf32>
    %103 = vector.broadcast %51 : f32 to vector<8x128xf32>
    %104 = arith.select %68, %102, %103 : vector<8x128xi1>, vector<8x128xf32>
    %c2_i32 = arith.constant 2 : i32
    %105 = vector.broadcast %c2_i32 : i32 to vector<8x128xi32>
    %106 = arith.andi %64, %105 : vector<8x128xi32>
    %c0_i32_4 = arith.constant 0 : i32
    %107 = vector.broadcast %c0_i32_4 : i32 to vector<8x128xi32>
    %108 = arith.cmpi ne, %106, %107 : vector<8x128xi32>
    %109 = arith.select %108, %74, %71 : vector<8x128xi1>, vector<8x128xf32>
    %110 = vector.broadcast %13 : f32 to vector<8x128xf32>
    %111 = arith.select %108, %110, %77 : vector<8x128xi1>, vector<8x128xf32>
    %112 = arith.select %108, %83, %80 : vector<8x128xi1>, vector<8x128xf32>
    %113 = vector.broadcast %27 : f32 to vector<8x128xf32>
    %114 = arith.select %108, %113, %86 : vector<8x128xi1>, vector<8x128xf32>
    %115 = arith.select %108, %92, %89 : vector<8x128xi1>, vector<8x128xf32>
    %116 = vector.broadcast %41 : f32 to vector<8x128xf32>
    %117 = arith.select %108, %116, %95 : vector<8x128xi1>, vector<8x128xf32>
    %118 = arith.select %108, %101, %98 : vector<8x128xi1>, vector<8x128xf32>
    %119 = vector.broadcast %55 : f32 to vector<8x128xf32>
    %120 = arith.select %108, %119, %104 : vector<8x128xi1>, vector<8x128xf32>
    %c4_i32 = arith.constant 4 : i32
    %121 = vector.broadcast %c4_i32 : i32 to vector<8x128xi32>
    %122 = arith.andi %64, %121 : vector<8x128xi32>
    %c0_i32_5 = arith.constant 0 : i32
    %123 = vector.broadcast %c0_i32_5 : i32 to vector<8x128xi32>
    %124 = arith.cmpi ne, %122, %123 : vector<8x128xi32>
    %125 = arith.select %124, %111, %109 : vector<8x128xi1>, vector<8x128xf32>
    %126 = arith.select %124, %114, %112 : vector<8x128xi1>, vector<8x128xf32>
    %127 = arith.select %124, %117, %115 : vector<8x128xi1>, vector<8x128xf32>
    %128 = arith.select %124, %120, %118 : vector<8x128xi1>, vector<8x128xf32>
    %129 = arith.mulf %63, %128 : vector<8x128xf32>
    %130 = arith.addf %127, %129 : vector<8x128xf32>
    %131 = arith.mulf %63, %130 : vector<8x128xf32>
    %132 = arith.addf %126, %131 : vector<8x128xf32>
    %133 = arith.mulf %63, %132 : vector<8x128xf32>
    %134 = arith.addf %125, %133 : vector<8x128xf32>
    %c0_6 = arith.constant 0 : index
    %c0_7 = arith.constant 0 : index
    %c0_8 = arith.constant 0 : index
    %135 = vector.load %arg4[%c0_6, %c0_7, %c0_8] : memref<1x8x128xf32, #tpu.memory_space<vmem>>, vector<1x8x128xf32>
    %136 = vector.shape_cast %135 : vector<1x8x128xf32> to vector<8x128xf32>
    %137 = vector.shape_cast %134 : vector<8x128xf32> to vector<1x8x128xf32>
    tpu.vector_store %arg4[%c0_6, %c0_7, %c0_8], %137 {strides = array<i32>} : memref<1x8x128xf32, #tpu.memory_space<vmem>>, vector<1x8x128xf32>,
    return
  }
  func.func @transform_0(%arg0: i32, %arg1: i32) -> (i32, i32) {
    %c0_i32 = arith.constant 0 : i32
    %c0_i32_0 = arith.constant 0 : i32
    %c0_i32_1 = arith.constant 0 : i32
    return %c0_i32, %c0_i32_0 : i32, i32
  }
  func.func @transform_1(%arg0: i32, %arg1: i32) -> (i32, i32, i32) {
    %c0_i32 = arith.constant 0 : i32
    %c0_i32_0 = arith.constant 0 : i32
    return %arg0, %arg1, %c0_i32 : i32, i32, i32
  }
  func.func @transform_2(%arg0: i32, %arg1: i32) -> (i32, i32, i32) {
    %c0_i32 = arith.constant 0 : i32
    %c0_i32_0 = arith.constant 0 : i32
    return %arg0, %arg1, %c0_i32 : i32, i32, i32
  }
}

</mosaic_0001>

<llo_original>
// kernel: tpu_custom_call.1
$region0: #{tpu_custom_call.1}
  #allocation0 [shape = 'u32[]', space=smem, size = 0x4, offset = 0x4, fixed_abs, tag = 'smem constant byte address 0x4 - core index']
  #allocation1 [shape = 'u32[144,128]{1,0:T(1,128)}', space=vmem, size = 0x12000, scoped, tag = 'internal scratch']
  %s0 = inlined_call_operand.hbm [shape: f32[6,28], index: 0, kind: input, shape index: {}]
  %s1 = inlined_call_operand.hbm [shape: f32[6,8,128], index: 1, kind: input, shape index: {}]
  %s2 = inlined_call_operand.hbm [shape: f32[6,8,128], index: 2, kind: output, shape index: {}]
  %s3 = sld [smem:[#allocation0]]
  $region49: #{tpu_custom_call.1} parent=0
    _
  %s5 = ssub.s32 1, %s3
  %s6 = scalar_select 0, %s5, %s3
  $region1: #{tpu_custom_call.1} parent=0
    #allocation2 [shape = 'u8[4096]{0}', space=smem, size = 0x1000, scoped, tag = 'input window, operand 0, single buffered']
    #allocation3 [shape = 's32[2]{0}', space=sflag, size = 0x8, scoped, tag = 'scoped memory for tpu_custom_call.1']
    #allocation4 [shape = 's32[2]{0}', space=sflag, size = 0x8, scoped, tag = 'scoped memory for tpu_custom_call.1']
    #allocation5 [shape = 's32[2]{0}', space=sflag, size = 0x8, scoped, tag = 'scoped memory for tpu_custom_call.1']
    #allocation6 [shape = 'u8[8192]{0}', space=vmem, size = 0x2000, scoped, tag = 'input window, operand 1']
    #allocation7 [shape = 'u8[8192]{0}', space=vmem, size = 0x2000, scoped, tag = 'output window, operand 0']
    %7 = vsyncpa [#allocation5], 0
    %8 = vsyncpa [#allocation3], 0
    %s9 = scalar_lea.sflag [#allocation3], 1
    %10 = vsyncpa %s9, 0
    %11 = vsyncpa [#allocation4], 0
    %s12 = scalar_lea.sflag [#allocation4], 1
    %13 = vsyncpa %s12, 0
    loop: start=0, step=1, limit=8
    $region2: #{tpu_custom_call.1} parent=1 // loop_pre_header
      _
    $region3: #{tpu_custom_call.1} parent=1 // loop_header
      %s15 = sphi 0, %s19
      %p16 = scmp.ge.s32.totalorder %s15, 8
      %s22 = sphi 0, %s34
      %s23 = sphi 0, %s30
      %s24 = sphi 0, %s22
      %s25 = sphi 0, %s23
      %s26 = sphi 0, %s24
      %s27 = sphi 0, %s25
      %s35 = sphi 0, %s35
      %s37 = sphi 0, %s35
      %s38 = sphi 0, %s37
      %s52 = sphi 0, %s38
      %s60 = sphi 0, %s62
      %s63 = sphi 0, %s60
      %s64 = sphi 0, %s63
      %s80 = sphi 0, %s64
      %s88 = sphi 0, %s90
      %s91 = sphi 0, %s88
      %s92 = sphi 0, %s91
      %s108 = sphi 0, %s92
    $region4: #{tpu_custom_call.1} parent=1 // loop_header_branch
      %18 = sbr.rel (%p16) target = $region8
    $region5: #{tpu_custom_call.1} parent=1 // loop_body
      %s20 = ssub.s32 %s15, 1
      %s21 = ssub.s32 %s15, 2
      %s28 = sadd.s32 1, %s23
      %p29 = scmp.ge.s32.totalorder %s28, 1
      %s30 = scalar_select %p29, 0, %s28
      %s31 = sadd.s32 1, %s22
      %s32 = scalar_select %p29, %s31, %s22
      %p33 = scmp.ge.s32.totalorder %s32, 6
      %s34 = scalar_select %p33, 0, %s32
      %s36 = sadd.s32 %s35, 1
      %p39 = scmp.eq.s32.totalorder %s15, 5
      %p40 = scmp.ne.s32.totalorder %s35, %s37
      %p41 = scmp.eq.s32.totalorder %s15, 0
      %p42 = por %p40, %p41
      %p43 = scmp.ne.s32.totalorder %s35, %s37
      %p44 = scmp.eq.s32.totalorder %s20, 5
      %p45 = por %p43, %p44
      %p46 = scmp.ne.s32.totalorder %s37, %s38
      %p47 = scmp.eq.s32.totalorder %s20, 0
      %p48 = por %p46, %p47
      %p49 = scmp.ne.s32.totalorder %s37, %s38
      %p50 = scmp.eq.s32.totalorder %s21, 5
      %p51 = por %p49, %p50
      %p53 = scmp.ne.s32.totalorder %s38, %s52
      %p54 = scmp.eq.s32.totalorder %s21, 0
      %p55 = por %p53, %p54
      %s56 = ssub.s32 %s22, %s34
      %s57 = ssub.s32 %s23, %s30
      %s58 = sor.u32 %s56, %s57
      %p59 = scmp.eq.s32.totalorder %s58, 0
      %s61 = sadd.s32 %s60, 1
      %s62 = scalar_select %p59, %s60, %s61
      %p65 = pneg %p59
      %p66 = scmp.eq.s32.totalorder %s15, 5
      %p67 = por %p65, %p66
      %p68 = scmp.ne.s32.totalorder %s60, %s63
      %p69 = scmp.eq.s32.totalorder %s15, 0
      %p70 = por %p68, %p69
      %p71 = scmp.ne.s32.totalorder %s60, %s63
      %p72 = scmp.eq.s32.totalorder %s20, 5
      %p73 = por %p71, %p72
      %p74 = scmp.ne.s32.totalorder %s63, %s64
      %p75 = scmp.eq.s32.totalorder %s20, 0
      %p76 = por %p74, %p75
      %p77 = scmp.ne.s32.totalorder %s63, %s64
      %p78 = scmp.eq.s32.totalorder %s21, 5
      %p79 = por %p77, %p78
      %p81 = scmp.ne.s32.totalorder %s64, %s80
      %p82 = scmp.eq.s32.totalorder %s21, 0
      %p83 = por %p81, %p82
      %s84 = ssub.s32 %s22, %s34
      %s85 = ssub.s32 %s23, %s30
      %s86 = sor.u32 %s84, %s85
      %p87 = scmp.eq.s32.totalorder %s86, 0
      %s89 = sadd.s32 %s88, 1
      %s90 = scalar_select %p87, %s88, %s89
      %p93 = pneg %p87
      %p94 = scmp.eq.s32.totalorder %s15, 5
      %p95 = por %p93, %p94
      %p96 = scmp.ne.s32.totalorder %s88, %s91
      %p97 = scmp.eq.s32.totalorder %s15, 0
      %p98 = por %p96, %p97
      %p99 = scmp.ne.s32.totalorder %s88, %s91
      %p100 = scmp.eq.s32.totalorder %s20, 5
      %p101 = por %p99, %p100
      %p102 = scmp.ne.s32.totalorder %s91, %s92
      %p103 = scmp.eq.s32.totalorder %s20, 0
      %p104 = por %p102, %p103
      %p105 = scmp.ne.s32.totalorder %s91, %s92
      %p106 = scmp.eq.s32.totalorder %s21, 5
      %p107 = por %p105, %p106
      %p109 = scmp.ne.s32.totalorder %s92, %s108
      %p110 = scmp.eq.s32.totalorder %s21, 0
      %p111 = por %p109, %p110
      %p112 = scmp.le.s32.totalorder 1, %s15
      %p113 = scmp.lt.s32.totalorder %s15, 7
      %p114 = pnand %p112, %p113
      %p115 = pneg %p114
      // Predicated region
      $region9: #{tpu_custom_call.1} parent=5 // pred_check
        _
      $region10: #{tpu_custom_call.1} parent=5 // pred_check_branch
        %117 = sbr.rel (%p114) target = $region12
      $region11: #{tpu_custom_call.1} parent=5 // pred_region
        %s118 = ssub.s32 %s15, 1
        // Predicated region
        $region13: #{tpu_custom_call.1} parent=11 // pred_check
          %p119 = pneg %p48
        $region14: #{tpu_custom_call.1} parent=11 // pred_check_branch
          %121 = sbr.rel (%p119) target = $region16
        $region15: #{tpu_custom_call.1} parent=11 // pred_region
          %s123 = ssub.s32 128, 128
          %124 = vsyncadd [#allocation5], %s123
          %127 = dma.hbm_to_smem %s0, 128, [#allocation2], [#allocation5]
        $region16: #{tpu_custom_call.1} parent=11 // pred_fallthru
          _
      $region12: #{tpu_custom_call.1} parent=5 // pred_fallthru
        _
      %p128 = scmp.lt.s32.totalorder %s15, 6
      // Predicated region
      $region17: #{tpu_custom_call.1} parent=5 // pred_check
        %p129 = pneg %p128
      $region18: #{tpu_custom_call.1} parent=5 // pred_check_branch
        %131 = sbr.rel (%p129) target = $region20
      $region19: #{tpu_custom_call.1} parent=5 // pred_region
        // Predicated region
        $region21: #{tpu_custom_call.1} parent=19 // pred_check
          %p132 = pneg %p70
        $region22: #{tpu_custom_call.1} parent=19 // pred_check_branch
          %134 = sbr.rel (%p132) target = $region24
        $region23: #{tpu_custom_call.1} parent=19 // pred_region
          %s135 = sand.u32 %s60, 1
          %s136 = scalar_lea.sflag [#allocation3], %s135
          %s137 = sand.u32 %s60, 1
          %s138 = smul.addr %s137, 8
          %s139 = scalar_lea.vmem [#allocation6], %s138
          %s141 = ssub.s32 128, 128
          %142 = vsyncadd %s136, %s141
          %s143 = sadd.s32 %s23, %s22
          %s144 = smul.addr %s143, 128
          %s145 = scalar_lea.hbm %s1, %s144
          %s147 = sshll.u32 %s139, 4
          %s148 = int_to_ptr.vmem [resolvable:$true] %s147
          %150 = dma.hbm_to_vmem [thread:$0]  %s145, 128, %s148, %s136
        $region24: #{tpu_custom_call.1} parent=19 // pred_fallthru
          _
      $region20: #{tpu_custom_call.1} parent=5 // pred_fallthru
        _
      %p151 = scmp.le.s32.totalorder 1, %s15
      %p152 = scmp.lt.s32.totalorder %s15, 7
      %p153 = pnand %p151, %p152
      %p154 = pneg %p153
      // Predicated region
      $region25: #{tpu_custom_call.1} parent=5 // pred_check
        _
      $region26: #{tpu_custom_call.1} parent=5 // pred_check_branch
        %156 = sbr.rel (%p153) target = $region28
      $region27: #{tpu_custom_call.1} parent=5 // pred_region
        %s157 = ssub.s32 %s15, 1
        // Predicated region
        $region29: #{tpu_custom_call.1} parent=27 // pred_check
          %p158 = pneg %p48
        $region30: #{tpu_custom_call.1} parent=27 // pred_check_branch
          %160 = sbr.rel (%p158) target = $region32
        $region31: #{tpu_custom_call.1} parent=27 // pred_region
          %161 = dma.done [#allocation5], 128
        $region32: #{tpu_custom_call.1} parent=27 // pred_fallthru
          _
        %s162 = sand.u32 %s63, 1
        %s163 = scalar_lea.sflag [#allocation3], %s162
        %s164 = sand.u32 %s63, 1
        %s165 = smul.addr %s164, 8
        %s166 = scalar_lea.vmem [#allocation6], %s165
        // Predicated region
        $region33: #{tpu_custom_call.1} parent=27 // pred_check
          %p167 = pneg %p76
        $region34: #{tpu_custom_call.1} parent=27 // pred_check_branch
          %169 = sbr.rel (%p167) target = $region36
        $region35: #{tpu_custom_call.1} parent=27 // pred_region
          %170 = dma.done %s163, 128
        $region36: #{tpu_custom_call.1} parent=27 // pred_fallthru
          _
        %171 = sfence
        %p172 = pneg %p48
        %p173 = pneg %p45
        %s174 = sand.u32 %s63, 1
        %s175 = scalar_lea.sflag [#allocation3], %s174
        %s176 = sand.u32 %s63, 1
        %s177 = smul.addr %s176, 8
        %s178 = scalar_lea.vmem [#allocation6], %s177
        %p179 = pneg %p76
        %p180 = pneg %p73
        %p181 = pneg %p104
        %p182 = pneg %p101
        %s183 = sand.u32 %s91, 1
        %s184 = scalar_lea.sflag [#allocation4], %s183
        %s185 = sand.u32 %s91, 1
        %s186 = smul.addr %s185, 8
        %s187 = scalar_lea.vmem [#allocation7], %s186
        %s188 = smul.u32 %s24, 128
        %s189 = sld [smem:[#allocation2 + %s188]]
        %s190 = sadd.s32 %s188, 1
        %s191 = sld [smem:[#allocation2 + %s190]]
        %s192 = sadd.s32 %s188, 2
        %s193 = sld [smem:[#allocation2 + %s192]]
        %s194 = sadd.s32 %s188, 3
        %s195 = sld [smem:[#allocation2 + %s194]]
        %s196 = sadd.s32 %s188, 4
        %s197 = sld [smem:[#allocation2 + %s196]]
        %s198 = sadd.s32 %s188, 5
        %s199 = sld [smem:[#allocation2 + %s198]]
        %s200 = sadd.s32 %s188, 6
        %s201 = sld [smem:[#allocation2 + %s200]]
        %s202 = sadd.s32 %s188, 7
        %s203 = sld [smem:[#allocation2 + %s202]]
        %s204 = sadd.s32 %s188, 8
        %s205 = sld [smem:[#allocation2 + %s204]]
        %s206 = sadd.s32 %s188, 9
        %s207 = sld [smem:[#allocation2 + %s206]]
        %s208 = sadd.s32 %s188, 10
        %s209 = sld [smem:[#allocation2 + %s208]]
        %s210 = sadd.s32 %s188, 11
        %s211 = sld [smem:[#allocation2 + %s210]]
        %s212 = sadd.s32 %s188, 12
        %s213 = sld [smem:[#allocation2 + %s212]]
        %s214 = sadd.s32 %s188, 13
        %s215 = sld [smem:[#allocation2 + %s214]]
        %s216 = sadd.s32 %s188, 14
        %s217 = sld [smem:[#allocation2 + %s216]]
        %s218 = sadd.s32 %s188, 15
        %s219 = sld [smem:[#allocation2 + %s218]]
        %s220 = sadd.s32 %s188, 16
        %s221 = sld [smem:[#allocation2 + %s220]]
        %s222 = sadd.s32 %s188, 17
        %s223 = sld [smem:[#allocation2 + %s222]]
        %s224 = sadd.s32 %s188, 18
        %s225 = sld [smem:[#allocation2 + %s224]]
        %s226 = sadd.s32 %s188, 19
        %s227 = sld [smem:[#allocation2 + %s226]]
        %s228 = sadd.s32 %s188, 20
        %s229 = sld [smem:[#allocation2 + %s228]]
        %s230 = sadd.s32 %s188, 21
        %s231 = sld [smem:[#allocation2 + %s230]]
        %s232 = sadd.s32 %s188, 22
        %s233 = sld [smem:[#allocation2 + %s232]]
        %s234 = sadd.s32 %s188, 23
        %s235 = sld [smem:[#allocation2 + %s234]]
        %s236 = sadd.s32 %s188, 24
        %s237 = sld [smem:[#allocation2 + %s236]]
        %s238 = sadd.s32 %s188, 25
        %s239 = sld [smem:[#allocation2 + %s238]]
        %s240 = sadd.s32 %s188, 26
        %s241 = sld [smem:[#allocation2 + %s240]]
        %s242 = sadd.s32 %s188, 27
        %s243 = sld [smem:[#allocation2 + %s242]]
        %v244 = vld [vmem:[%s166] sm:$0xff]
        %v245 = vmul.f32 %v244, 7.0
        %v246 = vfloor.f32 %v245
        %v247 = vmin.f32 %v246, 6.0
        %v248 = vsub.f32 %v245, %v247
        %v249 = vcvt.f32.s32.to.zero.pseudo %v247
        %v250 = vand.u32 %v249, 1
        %vm251 = vcmp.ne.s32.totalorder %v250, 0
        %v252 = vstv %s191
        %v253 = vstv %s189
        %v254 = vsel %vm251, %v252, %v253
        %v255 = vstv %s195
        %v256 = vstv %s193
        %v257 = vsel %vm251, %v255, %v256
        %v258 = vstv %s199
        %v259 = vstv %s197
        %v260 = vsel %vm251, %v258, %v259
        %v261 = vstv %s205
        %v262 = vstv %s203
        %v263 = vsel %vm251, %v261, %v262
        %v264 = vstv %s209
        %v265 = vstv %s207
        %v266 = vsel %vm251, %v264, %v265
        %v267 = vstv %s213
        %v268 = vstv %s211
        %v269 = vsel %vm251, %v267, %v268
        %v270 = vstv %s219
        %v271 = vstv %s217
        %v272 = vsel %vm251, %v270, %v271
        %v273 = vstv %s223
        %v274 = vstv %s221
        %v275 = vsel %vm251, %v273, %v274
        %v276 = vstv %s227
        %v277 = vstv %s225
        %v278 = vsel %vm251, %v276, %v277
        %v279 = vstv %s233
        %v280 = vstv %s231
        %v281 = vsel %vm251, %v279, %v280
        %v282 = vstv %s237
        %v283 = vstv %s235
        %v284 = vsel %vm251, %v282, %v283
        %v285 = vstv %s241
        %v286 = vstv %s239
        %v287 = vsel %vm251, %v285, %v286
        %v288 = vand.u32 %v249, 2
        %vm289 = vcmp.ne.s32.totalorder %v288, 0
        %v290 = vsel %vm289, %v257, %v254
        %v291 = vstv %s201
        %v292 = vsel %vm289, %v291, %v260
        %v293 = vsel %vm289, %v266, %v263
        %v294 = vstv %s215
        %v295 = vsel %vm289, %v294, %v269
        %v296 = vsel %vm289, %v275, %v272
        %v297 = vstv %s229
        %v298 = vsel %vm289, %v297, %v278
        %v299 = vsel %vm289, %v284, %v281
        %v300 = vstv %s243
        %v301 = vsel %vm289, %v300, %v287
        %v302 = vand.u32 %v249, 4
        %vm303 = vcmp.ne.s32.totalorder %v302, 0
        %v304 = vsel %vm303, %v292, %v290
        %v305 = vsel %vm303, %v295, %v293
        %v306 = vsel %vm303, %v298, %v296
        %v307 = vsel %vm303, %v301, %v299
        %v308 = vmul.f32 %v248, %v307
        %v309 = vadd.f32 %v306, %v308
        %v310 = vmul.f32 %v248, %v309
        %v311 = vadd.f32 %v305, %v310
        %v312 = vmul.f32 %v248, %v311
        %v313 = vadd.f32 %v304, %v312
        %314 = vst [vmem:[%s187] sm:$0xff] %v313
        %s315 = sand.u32 %s91, 1
        %s316 = scalar_lea.sflag [#allocation4], %s315
        %s317 = sand.u32 %s91, 1
        %s318 = smul.addr %s317, 8
        %s319 = scalar_lea.vmem [#allocation7], %s318
        // Predicated region
        $region37: #{tpu_custom_call.1} parent=27 // pred_check
          %p320 = pneg %p101
        $region38: #{tpu_custom_call.1} parent=27 // pred_check_branch
          %322 = sbr.rel (%p320) target = $region40
        $region39: #{tpu_custom_call.1} parent=27 // pred_region
          %s324 = ssub.s32 128, 128
          %325 = vsyncadd %s316, %s324
          %s326 = sadd.s32 %s25, %s24
          %s327 = smul.addr %s326, 128
          %s328 = scalar_lea.hbm %s2, %s327
          %s330 = sshll.u32 %s319, 4
          %s331 = int_to_ptr.vmem [resolvable:$true] %s330
          %333 = dma.vmem_to_hbm [thread:$0]  %s331, 128, %s328, %s316
        $region40: #{tpu_custom_call.1} parent=27 // pred_fallthru
          _
      $region28: #{tpu_custom_call.1} parent=5 // pred_fallthru
        _
      %p334 = scmp.le.s32.totalorder 2, %s15
      // Predicated region
      $region41: #{tpu_custom_call.1} parent=5 // pred_check
        %p335 = pneg %p334
      $region42: #{tpu_custom_call.1} parent=5 // pred_check_branch
        %337 = sbr.rel (%p335) target = $region44
      $region43: #{tpu_custom_call.1} parent=5 // pred_region
        %s338 = ssub.s32 %s15, 2
        // Predicated region
        $region45: #{tpu_custom_call.1} parent=43 // pred_check
          %p339 = pneg %p107
        $region46: #{tpu_custom_call.1} parent=43 // pred_check_branch
          %341 = sbr.rel (%p339) target = $region48
        $region47: #{tpu_custom_call.1} parent=43 // pred_region
          %s342 = sand.u32 %s92, 1
          %s343 = scalar_lea.sflag [#allocation4], %s342
          %s344 = sand.u32 %s92, 1
          %s345 = smul.addr %s344, 8
          %s346 = scalar_lea.vmem [#allocation7], %s345
          %347 = dma.done %s343, 128
        $region48: #{tpu_custom_call.1} parent=43 // pred_fallthru
          _
      $region44: #{tpu_custom_call.1} parent=5 // pred_fallthru
        _
    $region6: #{tpu_custom_call.1} parent=1 // loop_footer
      %s19 = sadd.s32 1, %s15
    $region7: #{tpu_custom_call.1} parent=1 // loop_footer_branch
      %14 = sbr.rel target = $region3
    $region8: #{tpu_custom_call.1} parent=1 // loop_exit
      _
    %348 = vsyncpa [#allocation3], 1
    %s349 = scalar_lea.sflag [#allocation3], 1
    %350 = vsyncpa %s349, 1
    %351 = vsyncpa [#allocation4], 1
    %s352 = scalar_lea.sflag [#allocation4], 1
    %353 = vsyncpa %s352, 1
    %354 = vsyncpa [#allocation5], 1
    %s355 = scalar_lea.sflag [#allocation5], 1
    %356 = vsyncpa %s355, 1

</llo_original>
